<compile_context>
chip_gen: v5e
topology: v5e:2x2
jax: 0.10.0
libtpu: 0.0.40
codegen_flags: <defaults>
</compile_context>

<pallas_src>
import functools

import jax
import jax.numpy as jnp
from jax.experimental import pallas as pl
from jax.experimental.pallas import tpu as pltpu


# ----------------------------------------------------------------------------
# Kernels
# ----------------------------------------------------------------------------
def _ffn_kernel_resident(x_ref, w1_ref, b1_ref, w2_ref, b2_ref, o_ref):
    # x_ref: (tm, d_model); w1_ref: (d_model, d_ff); b1_ref: (1, d_ff)
    # w2_ref: (d_ff, d_model); b2_ref: (1, d_model); o_ref: (tm, d_model)
    # Constant index_maps on the weights => single HBM->VMEM DMA, reused by
    # every row tile.
    x = x_ref[...].astype(w1_ref.dtype)
    h = jnp.dot(x, w1_ref[...], preferred_element_type=jnp.float32)
    h = jnp.maximum(h + b1_ref[...].astype(jnp.float32), 0.0)          # ReLU, f32
    y = jnp.dot(h.astype(w2_ref.dtype), w2_ref[...],
                preferred_element_type=jnp.float32)
    y = y + b2_ref[...].astype(jnp.float32)
    o_ref[...] = y.astype(o_ref.dtype)                                 # dropout = id


def _ffn_kernel_stream(x_ref, w1_ref, b1_ref, w2_ref, b2_ref, o_ref, acc_ref):
    # d_ff streamed in tk chunks along grid axis 1 ("arbitrary"); acc_ref is an
    # f32 (tm, d_model) accumulator resident across the k axis.
    k = pl.program_id(1)
    last = pl.num_programs(1) - 1

    @pl.when(k == 0)
    def _init():
        acc_ref[...] = jnp.zeros_like(acc_ref)

    x = x_ref[...].astype(w1_ref.dtype)
    h = jnp.dot(x, w1_ref[...], preferred_element_type=jnp.float32)
    h = jnp.maximum(h + b1_ref[...].astype(jnp.float32), 0.0)          # ReLU, f32
    part = jnp.dot(h.astype(w2_ref.dtype), w2_ref[...],
                   preferred_element_type=jnp.float32)

    @pl.when(k < last)
    def _accumulate():
        acc_ref[...] += part

    @pl.when(k == last)
    def _store():
        # Epilogue fused with the last partial product (saves one f32 RMW).
        y = acc_ref[...] + part + b2_ref[...].astype(jnp.float32)
        o_ref[...] = y.astype(o_ref.dtype)


# ----------------------------------------------------------------------------
# Tiling helpers
# ----------------------------------------------------------------------------
def _round_up(x, m):
    return (x + m - 1) // m * m


def _pick_tk(d_ff, tk):
    """tk must divide d_ff and be a multiple of 128 (or equal d_ff)."""
    tk = min(tk, d_ff)
    if d_ff % tk == 0 and (tk % 128 == 0 or tk == d_ff):
        return tk
    cand = (tk // 128) * 128
    while cand >= 128:
        if d_ff % cand == 0:
            return cand
        cand -= 128
    return d_ff


@functools.lru_cache(maxsize=1)
def _vmem_budget_bytes():
    """Per-generation VMEM budget: 85% of physical capacity (64 MiB fallback)."""
    cap = 64 * 1024 * 1024
    try:
        info_cap = int(pltpu.get_tpu_info().vmem_capacity_bytes)
        if info_cap > 0:
            cap = info_cap
    except Exception:  # non-TPU backend / older jax: stay with portable 64 MiB
        pass
    return int(cap * 0.85)


# ----------------------------------------------------------------------------
# Wrapper
# ----------------------------------------------------------------------------
@functools.partial(jax.jit, static_argnames=("tm", "tk"))
def feed_forward_nn(x, w1, b1, w2, b2, *, tm=512, tk=None):
    """x: (B, S, d_model) -> (B, S, d_model). Weights stored (in_dim, out_dim).

    tk=None: keep the whole W1/W2 resident in VMEM when they fit the chip's
    budget (fast path); otherwise (or when tk is given) stream d_ff in chunks.
    """
    B, S, d_model = x.shape
    d_ff = w1.shape[1]
    M = B * S
    out_dtype = x.dtype

    # Wrapper-side cast: if weights are narrower (e.g. bf16) than x, cast once
    # here instead of re-casting the resident x tile every k step.
    if jnp.dtype(w1.dtype).itemsize < jnp.dtype(x.dtype).itemsize:
        x = x.astype(w1.dtype)
    x2d = x.reshape(M, d_model)

    xbytes = jnp.dtype(x2d.dtype).itemsize
    obytes = jnp.dtype(out_dtype).itemsize
    wbytes = jnp.dtype(w1.dtype).itemsize
    budget = _vmem_budget_bytes()

    # Row tile: sublane aligned, clamped to the problem; when M allows, make at
    # least 2 row tiles so both v7x TensorCores get work.
    tm = max(8, min(tm, _round_up(M, 8)))
    if M >= 16 and pl.cdiv(M, tm) < 2:
        tm = _round_up(pl.cdiv(M, 2), 8)

    weight_bytes = (d_model * d_ff + d_ff * d_model + d_ff + d_model) * wbytes

    def resident_footprint(tm_):
        # 2x: double-buffered x/out tiles; weights conservatively counted with
        # 2 buffers too (constant index_map => DMA'd once, see Buffered TODO).
        return (2 * tm_ * d_model * (xbytes + obytes)
                + 2 * weight_bytes
                + tm_ * d_ff * 4)          # f32 hidden intermediate

    use_resident = (tk is None) and (resident_footprint(tm) <= budget)

    if use_resident:
        footprint = resident_footprint(tm)
        vmem_limit = int(min(budget, max(int(1.25 * footprint), 32 * 1024 * 1024)))
        out2d = pl.pallas_call(
            _ffn_kernel_resident,
            out_shape=jax.ShapeDtypeStruct((M, d_model), out_dtype),
            grid_spec=pltpu.PrefetchScalarGridSpec(
                num_scalar_prefetch=0,
                grid=(pl.cdiv(M, tm),),
                in_specs=[
                    pl.BlockSpec((tm, d_model), lambda i: (i, 0)),     # x rows
                    pl.BlockSpec((d_model, d_ff), lambda i: (0, 0)),   # W1 (resident)
                    pl.BlockSpec((1, d_ff), lambda i: (0, 0)),         # b1 (resident)
                    pl.BlockSpec((d_ff, d_model), lambda i: (0, 0)),   # W2 (resident)
                    pl.BlockSpec((1, d_model), lambda i: (0, 0)),      # b2 (resident)
                ],
                out_specs=pl.BlockSpec((tm, d_model), lambda i: (i, 0)),
            ),
            compiler_params=pltpu.CompilerParams(
                dimension_semantics=("parallel",),
                vmem_limit_bytes=vmem_limit,
            ),
        )(x2d, w1, b1, w2, b2)
        return out2d.reshape(B, S, d_model)

    # ---- Streaming fallback: d_ff reduction axis, f32 accumulator. ----
    tk = _pick_tk(d_ff, d_ff if tk is None else tk)

    def stream_footprint(tm_, tk_):
        return (2 * tm_ * d_model * (xbytes + obytes)                       # x + out
                + 2 * (d_model * tk_ + tk_ * d_model + tk_ + d_model) * wbytes
                + tm_ * d_model * 4                                          # f32 acc
                + tm_ * tk_ * 4)                                             # f32 h

    # Shrink tk first, then tm, until the working set fits the chip budget.
    while stream_footprint(tm, tk) > budget and tk > 128:
        new_tk = _pick_tk(d_ff, max(128, tk // 2))
        if new_tk >= tk:
            break
        tk = new_tk
    while stream_footprint(tm, tk) > budget and tm > 8:
        tm = max(8, _round_up(tm // 2, 8))

    footprint = stream_footprint(tm, tk)
    vmem_limit = int(min(budget, max(int(1.25 * footprint), 32 * 1024 * 1024)))
    grid = (pl.cdiv(M, tm), d_ff // tk)                  # reduction axis last

    out2d = pl.pallas_call(
        _ffn_kernel_stream,
        out_shape=jax.ShapeDtypeStruct((M, d_model), out_dtype),
        grid_spec=pltpu.PrefetchScalarGridSpec(
            num_scalar_prefetch=0,
            grid=grid,
            in_specs=[
                pl.BlockSpec((tm, d_model), lambda i, k: (i, 0)),    # x rows
                pl.BlockSpec((d_model, tk), lambda i, k: (0, k)),    # W1 slab
                pl.BlockSpec((1, tk), lambda i, k: (0, k)),          # b1 slab
                pl.BlockSpec((tk, d_model), lambda i, k: (k, 0)),    # W2 slab
                pl.BlockSpec((1, d_model), lambda i, k: (0, 0)),     # b2
            ],
            out_specs=pl.BlockSpec((tm, d_model), lambda i, k: (i, 0)),
            scratch_shapes=[pltpu.VMEM((tm, d_model), jnp.float32)],
        ),
        compiler_params=pltpu.CompilerParams(
            dimension_semantics=("parallel", "arbitrary"),
            vmem_limit_bytes=vmem_limit,
        ),
    )(x2d, w1, b1, w2, b2)
    return out2d.reshape(B, S, d_model)


# ----------------------------------------------------------------------------
# Reference / init / test
# ----------------------------------------------------------------------------
def init_params(key, d_model, d_ff, dtype=jnp.float32):
    """nn.Linear-style init; weights stored as (in_dim, out_dim) = torch W.T."""
    k1, k2, k3, k4 = jax.random.split(key, 4)
    lim1 = 1.0 / (d_model ** 0.5)
    lim2 = 1.0 / (d_ff ** 0.5)
    w1 = jax.random.uniform(k1, (d_model, d_ff), dtype, -lim1, lim1)
    b1 = jax.random.uniform(k2, (1, d_ff), dtype, -lim1, lim1)
    w2 = jax.random.uniform(k3, (d_ff, d_model), dtype, -lim2, lim2)
    b2 = jax.random.uniform(k4, (1, d_model), dtype, -lim2, lim2)
    return w1, b1, w2, b2


def _reference(x, w1, b1, w2, b2):
    B, S, d_model = x.shape
    x2d = x.reshape(-1, d_model).astype(jnp.float32)
    h = jnp.maximum(
        jnp.dot(x2d, w1.astype(jnp.float32),
                precision=jax.lax.Precision.HIGHEST) + b1.astype(jnp.float32),
        0.0)
    y = jnp.dot(h, w2.astype(jnp.float32),
                precision=jax.lax.Precision.HIGHEST) + b2.astype(jnp.float32)
    return y.reshape(B, S, d_model)


if __name__ == "__main__":
    # Small, lane-dense shapes (d_model multiple of 128 avoids masked stores).
    B, S, d_model, d_ff = 2, 8, 128, 256
    key = jax.random.PRNGKey(0)
    kx, kp = jax.random.split(key)

    x = jax.random.normal(kx, (B, S, d_model), jnp.float32)
    w1, b1, w2, b2 = init_params(kp, d_model, d_ff, jnp.float32)
    ref = _reference(x, w1, b1, w2, b2)

    # --- 1) f32, weights-resident fast path (default tm / tk=None) ---
    out_res = jax.block_until_ready(feed_forward_nn(x, w1, b1, w2, b2))
    assert out_res.shape == (B, S, d_model)
    assert jnp.allclose(out_res, ref, atol=5e-4, rtol=5e-4)

    # --- 2) f32, streaming d_ff reduction path (tk=128 -> 2 k-steps) ---
    out_str = jax.block_until_ready(
        feed_forward_nn(x, w1, b1, w2, b2, tm=256, tk=128))
    assert out_str.shape == (B, S, d_model)
    assert jnp.allclose(out_str, ref, atol=5e-4, rtol=5e-4)

    # --- 3) bf16 weights/activations (f32 accumulation inside the kernel) ---
    xb = x.astype(jnp.bfloat16)
    w1b, b1b, w2b, b2b = (a.astype(jnp.bfloat16) for a in (w1, b1, w2, b2))
    refb = _reference(xb, w1b, b1b, w2b, b2b)
    outb = jax.block_until_ready(feed_forward_nn(xb, w1b, b1b, w2b, b2b))
    assert outb.shape == (B, S, d_model)
    assert jnp.allclose(outb.astype(jnp.float32), refb, atol=5e-2, rtol=5e-2)

    print("KERNEL_OK")
</pallas_src>

<mosaic_0001>
module attributes {stable_mosaic.version = 11 : i64} {
  func.func @_ffn_kernel_resident(%arg0: i32, %arg1: memref<8x128xf32, #tpu.memory_space<vmem>>, %arg2: memref<128x256xf32, #tpu.memory_space<vmem>>, %arg3: memref<1x256xf32, #tpu.memory_space<vmem>>, %arg4: memref<256x128xf32, #tpu.memory_space<vmem>>, %arg5: memref<1x128xf32, #tpu.memory_space<vmem>>, %arg6: memref<8x128xf32, #tpu.memory_space<vmem>>) attributes {dimension_semantics = [#tpu.dimension_semantics<parallel>], iteration_bounds = array<i64: 2>, scalar_prefetch = 0 : i64, scratch_operands = 0 : i64, tpu.core_type = #tpu.core_type<tc>, window_params = [{transform_indices = @transform_0, window_bounds = array<i64: 8, 128>}, {pipeline_mode = #tpu.pipeline_mode<synchronous>, transform_indices = @transform_1, window_bounds = array<i64: 128, 256>}, {pipeline_mode = #tpu.pipeline_mode<synchronous>, transform_indices = @transform_2, window_bounds = array<i64: 1, 256>}, {pipeline_mode = #tpu.pipeline_mode<synchronous>, transform_indices = @transform_3, window_bounds = array<i64: 256, 128>}, {pipeline_mode = #tpu.pipeline_mode<synchronous>, transform_indices = @transform_4, window_bounds = array<i64: 1, 128>}, {transform_indices = @transform_5, window_bounds = array<i64: 8, 128>}]} {
    %c0 = arith.constant 0 : index
    %c0_0 = arith.constant 0 : index
    %0 = vector.load %arg1[%c0, %c0_0] : memref<8x128xf32, #tpu.memory_space<vmem>>, vector<8x128xf32>
    %c0_1 = arith.constant 0 : index
    %c0_2 = arith.constant 0 : index
    %1 = vector.load %arg2[%c0_1, %c0_2] : memref<128x256xf32, #tpu.memory_space<vmem>>, vector<128x256xf32>
    %cst = arith.constant dense<0.000000e+00> : vector<8x256xf32>
    %2 = tpu.matmul %0, %1, %cst {dimension_numbers = #tpu.dot_dimension_numbers<[1], [0], [0], [1], [0, 0, 1, 1], [], []>} : vector<8x128xf32>, vector<128x256xf32>, vector<8x256xf32> -> vector<8x256xf32>
    %c0_3 = arith.constant 0 : index
    %c0_4 = arith.constant 0 : index
    %3 = vector.load %arg3[%c0_3, %c0_4] : memref<1x256xf32, #tpu.memory_space<vmem>>, vector<1x256xf32>
    %4 = vector.broadcast %3 : vector<1x256xf32> to vector<8x256xf32>
    %5 = arith.addf %2, %4 : vector<8x256xf32>
    %cst_5 = arith.constant 0.000000e+00 : f32
    %6 = vector.broadcast %cst_5 : f32 to vector<8x256xf32>
    %7 = arith.maximumf %5, %6 : vector<8x256xf32>
    %c0_6 = arith.constant 0 : index
    %c0_7 = arith.constant 0 : index
    %8 = vector.load %arg4[%c0_6, %c0_7] : memref<256x128xf32, #tpu.memory_space<vmem>>, vector<256x128xf32>
    %cst_8 = arith.constant dense<0.000000e+00> : vector<8x128xf32>
    %9 = tpu.matmul %7, %8, %cst_8 {dimension_numbers = #tpu.dot_dimension_numbers<[1], [0], [0], [1], [0, 0, 1, 1], [], []>} : vector<8x256xf32>, vector<256x128xf32>, vector<8x128xf32> -> vector<8x128xf32>
    %c0_9 = arith.constant 0 : index
    %c0_10 = arith.constant 0 : index
    %10 = vector.load %arg5[%c0_9, %c0_10] : memref<1x128xf32, #tpu.memory_space<vmem>>, vector<1x128xf32>
    %11 = vector.broadcast %10 : vector<1x128xf32> to vector<8x128xf32>
    %12 = arith.addf %9, %11 : vector<8x128xf32>
    %c0_11 = arith.constant 0 : index
    %c0_12 = arith.constant 0 : index
    %13 = vector.load %arg6[%c0_11, %c0_12] : memref<8x128xf32, #tpu.memory_space<vmem>>, vector<8x128xf32>
    tpu.vector_store %arg6[%c0_11, %c0_12], %12 {strides = array<i32>} : memref<8x128xf32, #tpu.memory_space<vmem>>, vector<8x128xf32>,
    return
  }
  func.func @transform_0(%arg0: i32) -> (i32, i32) {
    %c0_i32 = arith.constant 0 : i32
    %c0_i32_0 = arith.constant 0 : i32
    return %arg0, %c0_i32 : i32, i32
  }
  func.func @transform_1(%arg0: i32) -> (i32, i32) {
    %c0_i32 = arith.constant 0 : i32
    %c0_i32_0 = arith.constant 0 : i32
    %c0_i32_1 = arith.constant 0 : i32
    return %c0_i32, %c0_i32_0 : i32, i32
  }
  func.func @transform_2(%arg0: i32) -> (i32, i32) {
    %c0_i32 = arith.constant 0 : i32
    %c0_i32_0 = arith.constant 0 : i32
    %c0_i32_1 = arith.constant 0 : i32
    return %c0_i32, %c0_i32_0 : i32, i32
  }
  func.func @transform_3(%arg0: i32) -> (i32, i32) {
    %c0_i32 = arith.constant 0 : i32
    %c0_i32_0 = arith.constant 0 : i32
    %c0_i32_1 = arith.constant 0 : i32
    return %c0_i32, %c0_i32_0 : i32, i32
  }
  func.func @transform_4(%arg0: i32) -> (i32, i32) {
    %c0_i32 = arith.constant 0 : i32
    %c0_i32_0 = arith.constant 0 : i32
    %c0_i32_1 = arith.constant 0 : i32
    return %c0_i32, %c0_i32_0 : i32, i32
  }
  func.func @transform_5(%arg0: i32) -> (i32, i32) {
    %c0_i32 = arith.constant 0 : i32
    %c0_i32_0 = arith.constant 0 : i32
    return %arg0, %c0_i32 : i32, i32
  }
}

</mosaic_0001>

<llo_original>
// kernel: feed_forward_nn.1
$region0: #{feed_forward_nn.1}
  #allocation0 [shape = 'u32[]', space=smem, size = 0x4, offset = 0x4, fixed_abs, tag = 'smem constant byte address 0x4 - core index']
  #allocation1 [shape = 'u32[72,128]{1,0:T(1,128)}', space=vmem, size = 0x9000, scoped, tag = 'internal scratch']
  %s0 = inlined_call_operand.hbm [shape: f32[16,128], index: 0, kind: input, shape index: {}]
  %s1 = inlined_call_operand.hbm [shape: f32[128,256], index: 1, kind: input, shape index: {}]
  %s2 = inlined_call_operand.vmem [shape: f32[1,256], index: 2, kind: input, shape index: {}]
  %s3 = inlined_call_operand.hbm [shape: f32[256,128], index: 3, kind: input, shape index: {}]
  %s4 = inlined_call_operand.vmem [shape: f32[1,128], index: 4, kind: input, shape index: {}]
  %s5 = inlined_call_operand.hbm [shape: f32[16,128], index: 5, kind: output, shape index: {}]
  %s6 = sld [smem:[#allocation0]]
  $region65: #{feed_forward_nn.1} parent=0
    _
  %s8 = ssub.s32 1, %s6
  %s9 = scalar_select 0, %s8, %s6
  $region1: #{feed_forward_nn.1} parent=0
    #allocation2 [shape = 'u8[8192]{0}', space=vmem, size = 0x2000, scoped, tag = 'input window, operand 0']
    #allocation3 [shape = 's32[2]{0}', space=sflag, size = 0x8, scoped, tag = 'scoped memory for feed_forward_nn.1']
    #allocation4 [shape = 's32[2]{0}', space=sflag, size = 0x8, scoped, tag = 'scoped memory for feed_forward_nn.1']
    #allocation5 [shape = 'u8[131072]{0}', space=vmem, size = 0x20000, scoped, tag = 'input window, operand 1, single buffered']
    #allocation6 [shape = 's32[1]{0}', space=sflag, size = 0x4, scoped, tag = 'scoped memory for feed_forward_nn.1']
    #allocation7 [shape = 'u8[131072]{0}', space=vmem, size = 0x20000, scoped, tag = 'input window, operand 3, single buffered']
    #allocation8 [shape = 'u8[8192]{0}', space=vmem, size = 0x2000, scoped, tag = 'output window, operand 0']
    %10 = vsyncpa [#allocation3], 0
    %s11 = scalar_lea.sflag [#allocation3], 1
    %12 = vsyncpa %s11, 0
    %13 = vsyncpa [#allocation6], 0
    %14 = vsyncpa [#allocation4], 0
    %s15 = scalar_lea.sflag [#allocation4], 1
    %16 = vsyncpa %s15, 0
    loop: start=0, step=1, limit=4
    $region2: #{feed_forward_nn.1} parent=1 // loop_pre_header
      _
    $region3: #{feed_forward_nn.1} parent=1 // loop_header
      %s18 = sphi 0, %s22
      %p19 = scmp.ge.s32.totalorder %s18, 4
      %s28 = sphi 0, %s30
      %s31 = sphi 0, %s28
      %s32 = sphi 0, %s31
      %s48 = sphi 0, %s32
      %s52 = sphi 0, %s52
      %s54 = sphi 0, %s52
      %s55 = sphi 0, %s54
      %s69 = sphi 0, %s55
      %s73 = sphi 0, %s73
      %s75 = sphi 0, %s73
      %s76 = sphi 0, %s75
      %s90 = sphi 0, %s76
      %s94 = sphi 0, %s94
      %s96 = sphi 0, %s94
      %s97 = sphi 0, %s96
      %s111 = sphi 0, %s97
      %s115 = sphi 0, %s115
      %s117 = sphi 0, %s115
      %s118 = sphi 0, %s117
      %s132 = sphi 0, %s118
      %s138 = sphi 0, %s140
      %s141 = sphi 0, %s138
      %s142 = sphi 0, %s141
      %s158 = sphi 0, %s142
    $region4: #{feed_forward_nn.1} parent=1 // loop_header_branch
      %21 = sbr.rel (%p19) target = $region8
    $region5: #{feed_forward_nn.1} parent=1 // loop_body
      %s23 = ssub.s32 %s18, 1
      %s24 = ssub.s32 %s18, 2
      %s25 = sadd.s32 %s18, 1
      %s26 = ssub.s32 %s18, %s25
      %p27 = scmp.eq.s32.totalorder %s26, 0
      %s29 = sadd.s32 %s28, 1
      %s30 = scalar_select %p27, %s28, %s29
      %p33 = pneg %p27
      %p34 = scmp.eq.s32.totalorder %s18, 1
      %p35 = por %p33, %p34
      %p36 = scmp.ne.s32.totalorder %s28, %s31
      %p37 = scmp.eq.s32.totalorder %s18, 0
      %p38 = por %p36, %p37
      %p39 = scmp.ne.s32.totalorder %s28, %s31
      %p40 = scmp.eq.s32.totalorder %s23, 1
      %p41 = por %p39, %p40
      %p42 = scmp.ne.s32.totalorder %s31, %s32
      %p43 = scmp.eq.s32.totalorder %s23, 0
      %p44 = por %p42, %p43
      %p45 = scmp.ne.s32.totalorder %s31, %s32
      %p46 = scmp.eq.s32.totalorder %s24, 1
      %p47 = por %p45, %p46
      %p49 = scmp.ne.s32.totalorder %s32, %s48
      %p50 = scmp.eq.s32.totalorder %s24, 0
      %p51 = por %p49, %p50
      %s53 = sadd.s32 %s52, 1
      %p56 = scmp.eq.s32.totalorder %s18, 1
      %p57 = scmp.ne.s32.totalorder %s52, %s54
      %p58 = scmp.eq.s32.totalorder %s18, 0
      %p59 = por %p57, %p58
      %p60 = scmp.ne.s32.totalorder %s52, %s54
      %p61 = scmp.eq.s32.totalorder %s23, 1
      %p62 = por %p60, %p61
      %p63 = scmp.ne.s32.totalorder %s54, %s55
      %p64 = scmp.eq.s32.totalorder %s23, 0
      %p65 = por %p63, %p64
      %p66 = scmp.ne.s32.totalorder %s54, %s55
      %p67 = scmp.eq.s32.totalorder %s24, 1
      %p68 = por %p66, %p67
      %p70 = scmp.ne.s32.totalorder %s55, %s69
      %p71 = scmp.eq.s32.totalorder %s24, 0
      %p72 = por %p70, %p71
      %s74 = sadd.s32 %s73, 1
      %p77 = scmp.eq.s32.totalorder %s18, 1
      %p78 = scmp.ne.s32.totalorder %s73, %s75
      %p79 = scmp.eq.s32.totalorder %s18, 0
      %p80 = por %p78, %p79
      %p81 = scmp.ne.s32.totalorder %s73, %s75
      %p82 = scmp.eq.s32.totalorder %s23, 1
      %p83 = por %p81, %p82
      %p84 = scmp.ne.s32.totalorder %s75, %s76
      %p85 = scmp.eq.s32.totalorder %s23, 0
      %p86 = por %p84, %p85
      %p87 = scmp.ne.s32.totalorder %s75, %s76
      %p88 = scmp.eq.s32.totalorder %s24, 1
      %p89 = por %p87, %p88
      %p91 = scmp.ne.s32.totalorder %s76, %s90
      %p92 = scmp.eq.s32.totalorder %s24, 0
      %p93 = por %p91, %p92
      %s95 = sadd.s32 %s94, 1
      %p98 = scmp.eq.s32.totalorder %s18, 1
      %p99 = scmp.ne.s32.totalorder %s94, %s96
      %p100 = scmp.eq.s32.totalorder %s18, 0
      %p101 = por %p99, %p100
      %p102 = scmp.ne.s32.totalorder %s94, %s96
      %p103 = scmp.eq.s32.totalorder %s23, 1
      %p104 = por %p102, %p103
      %p105 = scmp.ne.s32.totalorder %s96, %s97
      %p106 = scmp.eq.s32.totalorder %s23, 0
      %p107 = por %p105, %p106
      %p108 = scmp.ne.s32.totalorder %s96, %s97
      %p109 = scmp.eq.s32.totalorder %s24, 1
      %p110 = por %p108, %p109
      %p112 = scmp.ne.s32.totalorder %s97, %s111
      %p113 = scmp.eq.s32.totalorder %s24, 0
      %p114 = por %p112, %p113
      %s116 = sadd.s32 %s115, 1
      %p119 = scmp.eq.s32.totalorder %s18, 1
      %p120 = scmp.ne.s32.totalorder %s115, %s117
      %p121 = scmp.eq.s32.totalorder %s18, 0
      %p122 = por %p120, %p121
      %p123 = scmp.ne.s32.totalorder %s115, %s117
      %p124 = scmp.eq.s32.totalorder %s23, 1
      %p125 = por %p123, %p124
      %p126 = scmp.ne.s32.totalorder %s117, %s118
      %p127 = scmp.eq.s32.totalorder %s23, 0
      %p128 = por %p126, %p127
      %p129 = scmp.ne.s32.totalorder %s117, %s118
      %p130 = scmp.eq.s32.totalorder %s24, 1
      %p131 = por %p129, %p130
      %p133 = scmp.ne.s32.totalorder %s118, %s132
      %p134 = scmp.eq.s32.totalorder %s24, 0
      %p135 = por %p133, %p134
      %s136 = ssub.s32 %s18, %s25
      %p137 = scmp.eq.s32.totalorder %s136, 0
      %s139 = sadd.s32 %s138, 1
      %s140 = scalar_select %p137, %s138, %s139
      %p143 = pneg %p137
      %p144 = scmp.eq.s32.totalorder %s18, 1
      %p145 = por %p143, %p144
      %p146 = scmp.ne.s32.totalorder %s138, %s141
      %p147 = scmp.eq.s32.totalorder %s18, 0
      %p148 = por %p146, %p147
      %p149 = scmp.ne.s32.totalorder %s138, %s141
      %p150 = scmp.eq.s32.totalorder %s23, 1
      %p151 = por %p149, %p150
      %p152 = scmp.ne.s32.totalorder %s141, %s142
      %p153 = scmp.eq.s32.totalorder %s23, 0
      %p154 = por %p152, %p153
      %p155 = scmp.ne.s32.totalorder %s141, %s142
      %p156 = scmp.eq.s32.totalorder %s24, 1
      %p157 = por %p155, %p156
      %p159 = scmp.ne.s32.totalorder %s142, %s158
      %p160 = scmp.eq.s32.totalorder %s24, 0
      %p161 = por %p159, %p160
      %p162 = scmp.le.s32.totalorder 1, %s18
      %p163 = scmp.lt.s32.totalorder %s18, 3
      %p164 = pnand %p162, %p163
      %p165 = pneg %p164
      // Predicated region
      $region9: #{feed_forward_nn.1} parent=5 // pred_check
        _
      $region10: #{feed_forward_nn.1} parent=5 // pred_check_branch
        %167 = sbr.rel (%p164) target = $region12
      $region11: #{feed_forward_nn.1} parent=5 // pred_region
        %s168 = ssub.s32 %s18, 1
        // Predicated region
        $region13: #{feed_forward_nn.1} parent=11 // pred_check
          %p169 = pneg %p65
        $region14: #{feed_forward_nn.1} parent=11 // pred_check_branch
          %171 = sbr.rel (%p169) target = $region16
        $region15: #{feed_forward_nn.1} parent=11 // pred_region
          %173 = vsyncadd [#allocation6], 0
          %s174 = sshll.u32 %s1, 4
          %s175 = int_to_ptr.hbm [resolvable:$true] %s174
          %s176 = sshll.u32 [#allocation5], 4
          %s177 = int_to_ptr.vmem [resolvable:$true] %s176
          %182 = dma.hbm_to_vmem [thread:$0]  %s175, 4096, %s177, [#allocation6], 256, 256, 16
        $region16: #{feed_forward_nn.1} parent=11 // pred_fallthru
          _
        // Predicated region
        $region17: #{feed_forward_nn.1} parent=11 // pred_check
          %p183 = pneg %p86
        $region18: #{feed_forward_nn.1} parent=11 // pred_check_branch
          %185 = sbr.rel (%p183) target = $region20
        $region19: #{feed_forward_nn.1} parent=11 // pred_region
          _
        $region20: #{feed_forward_nn.1} parent=11 // pred_fallthru
          _
        // Predicated region
        $region21: #{feed_forward_nn.1} parent=11 // pred_check
          %p186 = pneg %p107
        $region22: #{feed_forward_nn.1} parent=11 // pred_check_branch
          %188 = sbr.rel (%p186) target = $region24
        $region23: #{feed_forward_nn.1} parent=11 // pred_region
          %190 = vsyncadd [#allocation6], 0
          %s191 = sshll.u32 %s3, 4
          %s192 = int_to_ptr.hbm [resolvable:$true] %s191
          %s193 = sshll.u32 [#allocation7], 4
          %s194 = int_to_ptr.vmem [resolvable:$true] %s193
          %199 = dma.hbm_to_vmem [thread:$0]  %s192, 4096, %s194, [#allocation6], 128, 128, 8
        $region24: #{feed_forward_nn.1} parent=11 // pred_fallthru
          _
        // Predicated region
        $region25: #{feed_forward_nn.1} parent=11 // pred_check
          %p200 = pneg %p128
        $region26: #{feed_forward_nn.1} parent=11 // pred_check_branch
          %202 = sbr.rel (%p200) target = $region28
        $region27: #{feed_forward_nn.1} parent=11 // pred_region
          _
        $region28: #{feed_forward_nn.1} parent=11 // pred_fallthru
          _
      $region12: #{feed_forward_nn.1} parent=5 // pred_fallthru
        _
      %p203 = scmp.lt.s32.totalorder %s18, 2
      // Predicated region
      $region29: #{feed_forward_nn.1} parent=5 // pred_check
        %p204 = pneg %p203
      $region30: #{feed_forward_nn.1} parent=5 // pred_check_branch
        %206 = sbr.rel (%p204) target = $region32
      $region31: #{feed_forward_nn.1} parent=5 // pred_region
        // Predicated region
        $region33: #{feed_forward_nn.1} parent=31 // pred_check
          %p207 = pneg %p38
        $region34: #{feed_forward_nn.1} parent=31 // pred_check_branch
          %209 = sbr.rel (%p207) target = $region36
        $region35: #{feed_forward_nn.1} parent=31 // pred_region
          %s210 = sand.u32 %s28, 1
          %s211 = scalar_lea.sflag [#allocation3], %s210
          %s212 = sand.u32 %s28, 1
          %s213 = smul.addr %s212, 8
          %s214 = scalar_lea.vmem [#allocation2], %s213
          %216 = vsyncadd %s211, 0
          %s217 = smul.addr %s18, 8
          %s218 = scalar_lea.hbm %s0, %s217
          %s220 = sshll.u32 %s218, 4
          %s221 = int_to_ptr.hbm [resolvable:$true] %s220
          %s222 = sshll.u32 %s214, 4
          %s223 = int_to_ptr.vmem [resolvable:$true] %s222
          %225 = dma.hbm_to_vmem [thread:$0]  %s221, 128, %s223, %s211
        $region36: #{feed_forward_nn.1} parent=31 // pred_fallthru
          _
      $region32: #{feed_forward_nn.1} parent=5 // pred_fallthru
        _
      %p226 = scmp.le.s32.totalorder 1, %s18
      %p227 = scmp.lt.s32.totalorder %s18, 3
      %p228 = pnand %p226, %p227
      %p229 = pneg %p228
      // Predicated region
      $region37: #{feed_forward_nn.1} parent=5 // pred_check
        _
      $region38: #{feed_forward_nn.1} parent=5 // pred_check_branch
        %231 = sbr.rel (%p228) target = $region40
      $region39: #{feed_forward_nn.1} parent=5 // pred_region
        %s232 = ssub.s32 %s18, 1
        %s233 = sand.u32 %s31, 1
        %s234 = scalar_lea.sflag [#allocation3], %s233
        %s235 = sand.u32 %s31, 1
        %s236 = smul.addr %s235, 8
        %s237 = scalar_lea.vmem [#allocation2], %s236
        // Predicated region
        $region41: #{feed_forward_nn.1} parent=39 // pred_check
          %p238 = pneg %p44
        $region42: #{feed_forward_nn.1} parent=39 // pred_check_branch
          %240 = sbr.rel (%p238) target = $region44
        $region43: #{feed_forward_nn.1} parent=39 // pred_region
          %242 = dma.done %s234, 128
        $region44: #{feed_forward_nn.1} parent=39 // pred_fallthru
          _
        // Predicated region
        $region45: #{feed_forward_nn.1} parent=39 // pred_check
          %p243 = pneg %p65
        $region46: #{feed_forward_nn.1} parent=39 // pred_check_branch
          %245 = sbr.rel (%p243) target = $region48
        $region47: #{feed_forward_nn.1} parent=39 // pred_region
          %247 = dma.done [#allocation6], 4096
        $region48: #{feed_forward_nn.1} parent=39 // pred_fallthru
          _
        // Predicated region
        $region49: #{feed_forward_nn.1} parent=39 // pred_check
          %p248 = pneg %p107
        $region50: #{feed_forward_nn.1} parent=39 // pred_check_branch
          %250 = sbr.rel (%p248) target = $region52
        $region51: #{feed_forward_nn.1} parent=39 // pred_region
          %252 = dma.done [#allocation6], 4096
        $region52: #{feed_forward_nn.1} parent=39 // pred_fallthru
          _
        %s253 = sand.u32 %s31, 1
        %s254 = scalar_lea.sflag [#allocation3], %s253
        %s255 = sand.u32 %s31, 1
        %s256 = smul.addr %s255, 8
        %s257 = scalar_lea.vmem [#allocation2], %s256
        %p258 = pneg %p44
        %p259 = pneg %p41
        %p260 = pneg %p65
        %p261 = pneg %p62
        %p262 = pneg %p86
        %p263 = pneg %p83
        %p264 = pneg %p107
        %p265 = pneg %p104
        %p266 = pneg %p128
        %p267 = pneg %p125
        %p268 = pneg %p154
        %p269 = pneg %p151
        %s270 = sand.u32 %s141, 1
        %s271 = scalar_lea.sflag [#allocation4], %s270
        %s272 = sand.u32 %s141, 1
        %s273 = smul.addr %s272, 8
        %s274 = scalar_lea.vmem [#allocation8], %s273
        %v275 = vld [vmem:[%s237] sm:$0xff]
        %v276 = vld [vmem:[#allocation5] sm:$0xff]
        %v277 = vld [vmem:[#allocation5 + $0x8] sm:$0xff]
        %v278 = vld [vmem:[#allocation5 + $0x10] sm:$0xff]
        %v279 = vld [vmem:[#allocation5 + $0x18] sm:$0xff]
        %v280 = vld [vmem:[#allocation5 + $0x20] sm:$0xff]
        %v281 = vld [vmem:[#allocation5 + $0x28] sm:$0xff]
        %v282 = vld [vmem:[#allocation5 + $0x30] sm:$0xff]
        %v283 = vld [vmem:[#allocation5 + $0x38] sm:$0xff]
        %v284 = vld [vmem:[#allocation5 + $0x40] sm:$0xff]
        %v285 = vld [vmem:[#allocation5 + $0x48] sm:$0xff]
        %v286 = vld [vmem:[#allocation5 + $0x50] sm:$0xff]
        %v287 = vld [vmem:[#allocation5 + $0x58] sm:$0xff]
        %v288 = vld [vmem:[#allocation5 + $0x60] sm:$0xff]
        %v289 = vld [vmem:[#allocation5 + $0x68] sm:$0xff]
        %v290 = vld [vmem:[#allocation5 + $0x70] sm:$0xff]
        %v291 = vld [vmem:[#allocation5 + $0x78] sm:$0xff]
        %v292 = vld [vmem:[#allocation5 + $0x80] sm:$0xff]
        %v293 = vld [vmem:[#allocation5 + $0x88] sm:$0xff]
        %v294 = vld [vmem:[#allocation5 + $0x90] sm:$0xff]
        %v295 = vld [vmem:[#allocation5 + $0x98] sm:$0xff]
        %v296 = vld [vmem:[#allocation5 + $0xa0] sm:$0xff]
        %v297 = vld [vmem:[#allocation5 + $0xa8] sm:$0xff]
        %v298 = vld [vmem:[#allocation5 + $0xb0] sm:$0xff]
        %v299 = vld [vmem:[#allocation5 + $0xb8] sm:$0xff]
        %v300 = vld [vmem:[#allocation5 + $0xc0] sm:$0xff]
        %v301 = vld [vmem:[#allocation5 + $0xc8] sm:$0xff]
        %v302 = vld [vmem:[#allocation5 + $0xd0] sm:$0xff]
        %v303 = vld [vmem:[#allocation5 + $0xd8] sm:$0xff]
        %v304 = vld [vmem:[#allocation5 + $0xe0] sm:$0xff]
        %v305 = vld [vmem:[#allocation5 + $0xe8] sm:$0xff]
        %v306 = vld [vmem:[#allocation5 + $0xf0] sm:$0xff]
        %v307 = vld [vmem:[#allocation5 + $0xf8] sm:$0xff]
        %v308 = vld [vmem:[%s2] sm:$0x3]
        %v310 = vperm.slane %v308, 0
        %v311 = vperm.slane %v308, 1
        %314 = vmatpush.msra.mxu0 %v306
        %315 = vmatpush.msra.mxu0 %v304
        %316 = vmatpush.msra.mxu0 %v302
        %317 = vmatpush.msra.mxu0 %v300
        %318 = vmatpush.msra.mxu0 %v298
        %319 = vmatpush.msra.mxu0 %v296
        %320 = vmatpush.msra.mxu0 %v294
        %321 = vmatpush.msra.mxu0 %v292
        %322 = vmatpush.msra.mxu0 %v290
        %323 = vmatpush.msra.mxu0 %v288
        %324 = vmatpush.msra.mxu0 %v286
        %325 = vmatpush.msra.mxu0 %v284
        %326 = vmatpush.msra.mxu0 %v282
        %327 = vmatpush.msra.mxu0 %v280
        %328 = vmatpush.msra.mxu0 %v278
        %329 = vmatpush.msra.mxu0 %v276
        %330 = vmatmul.f32.gmra.mxu0 %v275
        %v331 = vpop.f32.mrf.mxu0
        %v332 = vadd.f32 %v310, %v331
        %333 = vdwg.mxu0
        %334 = vmatpush.msra.mxu0 %v307
        %335 = vmatpush.msra.mxu0 %v305
        %336 = vmatpush.msra.mxu0 %v303
        %337 = vmatpush.msra.mxu0 %v301
        %338 = vmatpush.msra.mxu0 %v299
        %339 = vmatpush.msra.mxu0 %v297
        %340 = vmatpush.msra.mxu0 %v295
        %341 = vmatpush.msra.mxu0 %v293
        %342 = vmatpush.msra.mxu0 %v291
        %343 = vmatpush.msra.mxu0 %v289
        %344 = vmatpush.msra.mxu0 %v287
        %345 = vmatpush.msra.mxu0 %v285
        %346 = vmatpush.msra.mxu0 %v283
        %347 = vmatpush.msra.mxu0 %v281
        %348 = vmatpush.msra.mxu0 %v279
        %349 = vmatpush.msra.mxu0 %v277
        %350 = vmatmul.f32.gmra.mxu0 %v275
        %v351 = vpop.f32.mrf.mxu0
        %v352 = vadd.f32 %v311, %v351
        %353 = vdwg.mxu0
        %v354 = vmax.f32 %v332, 0.0
        %v355 = vmax.f32 %v352, 0.0
        %v356 = vld [vmem:[#allocation7] sm:$0xff]
        %v357 = vld [vmem:[#allocation7 + $0x8] sm:$0xff]
        %v358 = vld [vmem:[#allocation7 + $0x10] sm:$0xff]
        %v359 = vld [vmem:[#allocation7 + $0x18] sm:$0xff]
        %v360 = vld [vmem:[#allocation7 + $0x20] sm:$0xff]
        %v361 = vld [vmem:[#allocation7 + $0x28] sm:$0xff]
        %v362 = vld [vmem:[#allocation7 + $0x30] sm:$0xff]
        %v363 = vld [vmem:[#allocation7 + $0x38] sm:$0xff]
        %v364 = vld [vmem:[#allocation7 + $0x40] sm:$0xff]
        %v365 = vld [vmem:[#allocation7 + $0x48] sm:$0xff]
        %v366 = vld [vmem:[#allocation7 + $0x50] sm:$0xff]
        %v367 = vld [vmem:[#allocation7 + $0x58] sm:$0xff]
        %v368 = vld [vmem:[#allocation7 + $0x60] sm:$0xff]
        %v369 = vld [vmem:[#allocation7 + $0x68] sm:$0xff]
        %v370 = vld [vmem:[#allocation7 + $0x70] sm:$0xff]
        %v371 = vld [vmem:[#allocation7 + $0x78] sm:$0xff]
        %v372 = vld [vmem:[#allocation7 + $0x80] sm:$0xff]
        %v373 = vld [vmem:[#allocation7 + $0x88] sm:$0xff]
        %v374 = vld [vmem:[#allocation7 + $0x90] sm:$0xff]
        %v375 = vld [vmem:[#allocation7 + $0x98] sm:$0xff]
        %v376 = vld [vmem:[#allocation7 + $0xa0] sm:$0xff]
        %v377 = vld [vmem:[#allocation7 + $0xa8] sm:$0xff]
        %v378 = vld [vmem:[#allocation7 + $0xb0] sm:$0xff]
        %v379 = vld [vmem:[#allocation7 + $0xb8] sm:$0xff]
        %v380 = vld [vmem:[#allocation7 + $0xc0] sm:$0xff]
        %v381 = vld [vmem:[#allocation7 + $0xc8] sm:$0xff]
        %v382 = vld [vmem:[#allocation7 + $0xd0] sm:$0xff]
        %v383 = vld [vmem:[#allocation7 + $0xd8] sm:$0xff]
        %v384 = vld [vmem:[#allocation7 + $0xe0] sm:$0xff]
        %v385 = vld [vmem:[#allocation7 + $0xe8] sm:$0xff]
        %v386 = vld [vmem:[#allocation7 + $0xf0] sm:$0xff]
        %v387 = vld [vmem:[#allocation7 + $0xf8] sm:$0xff]
        %v388 = vld [vmem:[%s4] sm:$0x1]
        %v390 = vperm.slane %v388, 0
        %392 = vmatpush.msra.mxu0 %v371
        %393 = vmatpush.msra.mxu0 %v370
        %394 = vmatpush.msra.mxu0 %v369
        %395 = vmatpush.msra.mxu0 %v368
        %396 = vmatpush.msra.mxu0 %v367
        %397 = vmatpush.msra.mxu0 %v366
        %398 = vmatpush.msra.mxu0 %v365
        %399 = vmatpush.msra.mxu0 %v364
        %400 = vmatpush.msra.mxu0 %v363
        %401 = vmatpush.msra.mxu0 %v362
        %402 = vmatpush.msra.mxu0 %v361
        %403 = vmatpush.msra.mxu0 %v360
        %404 = vmatpush.msra.mxu0 %v359
        %405 = vmatpush.msra.mxu0 %v358
        %406 = vmatpush.msra.mxu0 %v357
        %407 = vmatpush.msra.mxu0 %v356
        %408 = vmatmul.f32.gmra.mxu0 %v354
        %v409 = vpop.f32.mrf.mxu0
        %v410 = vadd.f32 %v390, %v409
        %411 = vdwg.mxu0
        %412 = vmatpush.msra.mxu0 %v387
        %413 = vmatpush.msra.mxu0 %v386
        %414 = vmatpush.msra.mxu0 %v385
        %415 = vmatpush.msra.mxu0 %v384
        %416 = vmatpush.msra.mxu0 %v383
        %417 = vmatpush.msra.mxu0 %v382
        %418 = vmatpush.msra.mxu0 %v381
        %419 = vmatpush.msra.mxu0 %v380
        %420 = vmatpush.msra.mxu0 %v379
        %421 = vmatpush.msra.mxu0 %v378
        %422 = vmatpush.msra.mxu0 %v377
        %423 = vmatpush.msra.mxu0 %v376
        %424 = vmatpush.msra.mxu0 %v375
        %425 = vmatpush.msra.mxu0 %v374
        %426 = vmatpush.msra.mxu0 %v373
        %427 = vmatpush.msra.mxu0 %v372
        %428 = vmatmul.f32.gmra.mxu0 %v355
        %v429 = vpop.f32.mrf.mxu0
        %v430 = vadd.f32 %v410, %v429
        %431 = vdwg.mxu0
        %432 = vst [vmem:[%s274] sm:$0xff] %v430
        %s433 = sand.u32 %s141, 1
        %s434 = scalar_lea.sflag [#allocation4], %s433
        %s435 = sand.u32 %s141, 1
        %s436 = smul.addr %s435, 8
        %s437 = scalar_lea.vmem [#allocation8], %s436
        // Predicated region
        $region53: #{feed_forward_nn.1} parent=39 // pred_check
          %p438 = pneg %p151
        $region54: #{feed_forward_nn.1} parent=39 // pred_check_branch
          %440 = sbr.rel (%p438) target = $region56
        $region55: #{feed_forward_nn.1} parent=39 // pred_region
          %442 = vsyncadd %s434, 0
          %s443 = smul.addr %s23, 8
          %s444 = scalar_lea.hbm %s5, %s443
          %s446 = sshll.u32 %s437, 4
          %s447 = int_to_ptr.vmem [resolvable:$true] %s446
          %s448 = sshll.u32 %s444, 4
          %s449 = int_to_ptr.hbm [resolvable:$true] %s448
          %451 = dma.vmem_to_hbm [thread:$0]  %s447, 128, %s449, %s434
        $region56: #{feed_forward_nn.1} parent=39 // pred_fallthru
          _
      $region40: #{feed_forward_nn.1} parent=5 // pred_fallthru
        _
      %p452 = scmp.le.s32.totalorder 2, %s18
      // Predicated region
      $region57: #{feed_forward_nn.1} parent=5 // pred_check
        %p453 = pneg %p452
      $region58: #{feed_forward_nn.1} parent=5 // pred_check_branch
        %455 = sbr.rel (%p453) target = $region60
      $region59: #{feed_forward_nn.1} parent=5 // pred_region
        %s456 = ssub.s32 %s18, 2
        // Predicated region
        $region61: #{feed_forward_nn.1} parent=59 // pred_check
          %p457 = pneg %p157
        $region62: #{feed_forward_nn.1} parent=59 // pred_check_branch
          %459 = sbr.rel (%p457) target = $region64
        $region63: #{feed_forward_nn.1} parent=59 // pred_region
          %s460 = sand.u32 %s142, 1
          %s461 = scalar_lea.sflag [#allocation4], %s460
          %s462 = sand.u32 %s142, 1
          %s463 = smul.addr %s462, 8
          %s464 = scalar_lea.vmem [#allocation8], %s463
          %466 = dma.done %s461, 128
        $region64: #{feed_forward_nn.1} parent=59 // pred_fallthru
          _
      $region60: #{feed_forward_nn.1} parent=5 // pred_fallthru
        _
    $region6: #{feed_forward_nn.1} parent=1 // loop_footer
      %s22 = sadd.s32 1, %s18
    $region7: #{feed_forward_nn.1} parent=1 // loop_footer_branch
      %17 = sbr.rel target = $region3
    $region8: #{feed_forward_nn.1} parent=1 // loop_exit
      _
    %467 = vsyncpa [#allocation3], 1
    %s468 = scalar_lea.sflag [#allocation3], 1
    %469 = vsyncpa %s468, 1
    %470 = vsyncpa [#allocation6], 1
    %471 = vsyncpa [#allocation4], 1
    %s472 = scalar_lea.sflag [#allocation4], 1
    %473 = vsyncpa %s472, 1

</llo_original>
